<compile_context>
chip_gen: v6e
topology: v6e:2x2x1
jax: 0.10.0
libtpu: 0.0.40
codegen_flags: <defaults>
</compile_context>

<pallas_src>
import jax
import jax.numpy as jnp
from jax import lax
from jax.experimental import pallas as pl
from jax.experimental.pallas import tpu as pltpu

_INV_SQRT2 = 0.7071067811865476


def _intermediate_kernel(x_ref, w_ref, b_ref, o_ref):
    # x_ref: (tm, H)   w_ref: (tn, H)   b_ref: (1, tn)   o_ref: (tm, tn)
    y = lax.dot_general(
        x_ref[...], w_ref[...],
        dimension_numbers=(((1,), (1,)), ((), ())),   # x @ w.T on the MXU
        preferred_element_type=jnp.float32)
    y = y + b_ref[...].astype(jnp.float32)
    # exact GELU: 0.5 * y * (1 + erf(y / sqrt(2))) -- multiply, not divide.
    o_ref[...] = (0.5 * y * (1.0 + lax.erf(y * _INV_SQRT2))).astype(o_ref.dtype)


def _round_up(x, m):
    return (x + m - 1) // m * m


def _vmem_budget_bytes():
    """Per-generation scoped-VMEM budget (v7x has 64 MiB, v5e/v6e 128 MiB)."""
    cap = 64 * 1024 * 1024
    try:
        info = pltpu.get_tpu_info()
        cap = int(getattr(info, "vmem_capacity_bytes", cap))
    except Exception:
        pass  # no TPU info available; keep the conservative 64 MiB
    # ~25% headroom for compiler scratch; never request more than 100 MiB.
    return min(int(cap * 0.75), 100 * 1024 * 1024)


def _vmem_estimate(tm, tn, H, in_isz, out_isz):
    x_bytes = 2 * tm * H * in_isz        # double-buffered activation tile
    w_bytes = 2 * tn * H * in_isz        # double-buffered weight tile
    b_bytes = 2 * tn * in_isz            # double-buffered bias tile
    o_bytes = 2 * tm * tn * out_isz      # double-buffered output tile
    tmp_bytes = 3 * tm * tn * 4          # f32 matmul result + GELU temporaries
    return x_bytes + w_bytes + b_bytes + o_bytes + tmp_bytes


def _select_tiles(M, H, I, in_isz, out_isz, tm_target, tn_target, budget):
    # Row tile: full axis if small (block == full dim is always legal),
    # otherwise an MXU-friendly multiple of 8; shrink if even tn=128 can't fit.
    tm = M if M <= tm_target else tm_target

    def fits(tm_, tn_):
        return _vmem_estimate(tm_, tn_, H, in_isz, out_isz) <= budget

    while tm > 64 and not fits(tm, 128):
        tm = max(_round_up(tm // 2, 8), 64)

    # Lane tile: whole intermediate axis when it fits (activations read exactly
    # once, fewest grid steps), else the largest multiple of 128 within budget;
    # a non-divisible I just gives a masked last lane block via the cdiv grid.
    tn_pref = I if tn_target is None else min(I, tn_target)
    if tn_pref == I and fits(tm, I):
        return tm, I
    if I <= 128:
        return tm, I
    tn = (min(I, max(tn_pref, 128)) // 128) * 128
    tn = max(tn, 128)
    while tn > 128 and not fits(tm, tn):
        tn -= 128
    return tm, tn


def former_intermediate(hidden_states, weight, bias, *,
                        tm_target=256, tn_target=None, compute_dtype=None):
    """Forward pass of FormerIntermediate: GELU(hidden_states @ weight.T + bias).

    hidden_states: (B, S, H)
    weight:        (I, H)   -- torch nn.Linear layout (NOT transposed here)
    bias:          (I,)
    compute_dtype: optionally cast x/W (e.g. jnp.bfloat16) for the fast MXU
                   path; accumulation stays f32.
    """
    B, S, H = hidden_states.shape
    I, H_w = weight.shape
    assert H_w == H, "weight/hidden size mismatch"
    M = B * S
    out_dtype = hidden_states.dtype

    x2d = hidden_states.reshape(M, H)
    b2d = bias.reshape(1, I)
    if compute_dtype is not None:
        x2d = x2d.astype(compute_dtype)
        weight = weight.astype(compute_dtype)

    in_isz = jnp.dtype(x2d.dtype).itemsize
    out_isz = jnp.dtype(out_dtype).itemsize
    budget = _vmem_budget_bytes()
    tm, tn = _select_tiles(M, H, I, in_isz, out_isz, tm_target, tn_target, budget)

    num_m = pl.cdiv(M, tm)
    num_n = pl.cdiv(I, tn)

    cost = pl.CostEstimate(
        flops=2 * M * H * I,
        transcendentals=M * I,
        bytes_accessed=(num_n * M * H + I * H + I) * in_isz + M * I * out_isz,
    )

    out2d = pl.pallas_call(
        _intermediate_kernel,
        out_shape=jax.ShapeDtypeStruct((M, I), out_dtype),
        grid_spec=pltpu.PrefetchScalarGridSpec(
            num_scalar_prefetch=0,
            # N (intermediate) outer, M (rows) inner: each weight block is
            # DMA'd once per N tile. Ragged last M / N blocks are masked by
            # Pallas (no host-side padding or slicing needed).
            grid=(num_n, num_m),
            in_specs=[
                pl.BlockSpec((tm, H), lambda n, m: (m, 0)),   # activations
                pl.BlockSpec((tn, H), lambda n, m: (n, 0)),   # weight (I, H)
                pl.BlockSpec((1, tn), lambda n, m: (0, n)),   # bias
            ],
            out_specs=pl.BlockSpec((tm, tn), lambda n, m: (m, n)),
        ),
        compiler_params=pltpu.CompilerParams(
            # Shard the many-tile M axis across TensorCores on v7x; the small
            # N axis stays sequential so cores never get a lopsided split.
            dimension_semantics=("arbitrary", "parallel"),
            vmem_limit_bytes=budget,
        ),
        cost_estimate=cost,
    )(x2d, weight, b2d)

    return out2d.reshape(B, S, I)


def _reference(hidden_states, weight, bias):
    y = jnp.einsum("bsh,ih->bsi", hidden_states, weight) + bias
    return 0.5 * y * (1.0 + lax.erf(y * _INV_SQRT2))


if __name__ == "__main__":
    key = jax.random.PRNGKey(0)

    # Test 1: small config consistent with the module (hidden=32, inter=64);
    # single block on both axes (full dims).
    B, S, H, I = 2, 8, 32, 64
    kx, kw, kb, key = jax.random.split(key, 4)
    hs = jax.random.normal(kx, (B, S, H), dtype=jnp.float32)
    w = jax.random.normal(kw, (I, H), dtype=jnp.float32) * (1.0 / jnp.sqrt(H))
    b = jax.random.normal(kb, (I,), dtype=jnp.float32) * 0.02

    out = jax.block_until_ready(former_intermediate(hs, w, b))
    ref = _reference(hs, w, b)
    assert out.shape == (B, S, I)
    assert jnp.allclose(out, ref, atol=2e-5, rtol=2e-5)

    # Test 2: ragged row blocks (M=26 with tm=16) and ragged lane blocks
    # (I=320 with tn=256) -- exercises the masked last block on both axes,
    # with no host-side padding or slicing.
    B2, S2, H2, I2 = 2, 13, 32, 320
    kx2, kw2, kb2, key = jax.random.split(key, 4)
    hs2 = jax.random.normal(kx2, (B2, S2, H2), dtype=jnp.float32)
    w2 = jax.random.normal(kw2, (I2, H2), dtype=jnp.float32) * (1.0 / jnp.sqrt(H2))
    b2 = jax.random.normal(kb2, (I2,), dtype=jnp.float32) * 0.02

    out2 = jax.block_until_ready(
        former_intermediate(hs2, w2, b2, tm_target=16, tn_target=256))
    ref2 = _reference(hs2, w2, b2)
    assert out2.shape == (B2, S2, I2)
    assert jnp.allclose(out2, ref2, atol=2e-5, rtol=2e-5)

    print("KERNEL_OK")
</pallas_src>

<mosaic_0001>
module attributes {stable_mosaic.version = 11 : i64} {
  func.func @_intermediate_kernel(%arg0: i32, %arg1: i32, %arg2: memref<16x32xf32, #tpu.memory_space<vmem>>, %arg3: memref<64x32xf32, #tpu.memory_space<vmem>>, %arg4: memref<1x64xf32, #tpu.memory_space<vmem>>, %arg5: memref<16x64xf32, #tpu.memory_space<vmem>>) attributes {dimension_semantics = [#tpu.dimension_semantics<arbitrary>, #tpu.dimension_semantics<parallel>], iteration_bounds = array<i64: 1, 1>, scalar_prefetch = 0 : i64, scratch_operands = 0 : i64, tpu.core_type = #tpu.core_type<tc>, window_params = [{transform_indices = @transform_0, window_bounds = array<i64: 16, 32>}, {transform_indices = @transform_1, window_bounds = array<i64: 64, 32>}, {transform_indices = @transform_2, window_bounds = array<i64: 1, 64>}, {transform_indices = @transform_3, window_bounds = array<i64: 16, 64>}]} {
    %c0 = arith.constant 0 : index
    %c0_0 = arith.constant 0 : index
    %0 = vector.load %arg2[%c0, %c0_0] : memref<16x32xf32, #tpu.memory_space<vmem>>, vector<16x32xf32>
    %c0_1 = arith.constant 0 : index
    %c0_2 = arith.constant 0 : index
    %1 = vector.load %arg3[%c0_1, %c0_2] : memref<64x32xf32, #tpu.memory_space<vmem>>, vector<64x32xf32>
    %cst = arith.constant dense<0.000000e+00> : vector<16x64xf32>
    %2 = tpu.matmul %0, %1, %cst {dimension_numbers = #tpu.dot_dimension_numbers<[1], [1], [0], [0], [0, 0, 1, 0], [], []>} : vector<16x32xf32>, vector<64x32xf32>, vector<16x64xf32> -> vector<16x64xf32>
    %c0_3 = arith.constant 0 : index
    %c0_4 = arith.constant 0 : index
    %3 = vector.load %arg4[%c0_3, %c0_4] : memref<1x64xf32, #tpu.memory_space<vmem>>, vector<1x64xf32>
    %4 = vector.broadcast %3 : vector<1x64xf32> to vector<16x64xf32>
    %5 = arith.addf %2, %4 : vector<16x64xf32>
    %cst_5 = arith.constant 5.000000e-01 : f32
    %6 = vector.broadcast %cst_5 : f32 to vector<16x64xf32>
    %7 = arith.mulf %6, %5 : vector<16x64xf32>
    %cst_6 = arith.constant 0.707106769 : f32
    %8 = vector.broadcast %cst_6 : f32 to vector<16x64xf32>
    %9 = arith.mulf %5, %8 : vector<16x64xf32>
    %10 = math.erf %9 : vector<16x64xf32>
    %cst_7 = arith.constant 1.000000e+00 : f32
    %11 = vector.broadcast %cst_7 : f32 to vector<16x64xf32>
    %12 = arith.addf %11, %10 : vector<16x64xf32>
    %13 = arith.mulf %7, %12 : vector<16x64xf32>
    %c0_8 = arith.constant 0 : index
    %c0_9 = arith.constant 0 : index
    %14 = vector.load %arg5[%c0_8, %c0_9] : memref<16x64xf32, #tpu.memory_space<vmem>>, vector<16x64xf32>
    tpu.vector_store %arg5[%c0_8, %c0_9], %13 {strides = array<i32>} : memref<16x64xf32, #tpu.memory_space<vmem>>, vector<16x64xf32>,
    return
  }
  func.func @transform_0(%arg0: i32, %arg1: i32) -> (i32, i32) {
    %c0_i32 = arith.constant 0 : i32
    %c0_i32_0 = arith.constant 0 : i32
    return %arg1, %c0_i32 : i32, i32
  }
  func.func @transform_1(%arg0: i32, %arg1: i32) -> (i32, i32) {
    %c0_i32 = arith.constant 0 : i32
    %c0_i32_0 = arith.constant 0 : i32
    return %arg0, %c0_i32 : i32, i32
  }
  func.func @transform_2(%arg0: i32, %arg1: i32) -> (i32, i32) {
    %c0_i32 = arith.constant 0 : i32
    %c0_i32_0 = arith.constant 0 : i32
    return %c0_i32, %arg0 : i32, i32
  }
  func.func @transform_3(%arg0: i32, %arg1: i32) -> (i32, i32) {
    %c0_i32 = arith.constant 0 : i32
    return %arg1, %arg0 : i32, i32
  }
}

</mosaic_0001>

<llo_original>
// kernel: tpu_custom_call.1
$region0: #{tpu_custom_call.1}
  #allocation0 [shape = 'u32[]', space=smem, size = 0x4, offset = 0x4, fixed_abs, tag = 'smem constant byte address 0x4 - core index']
  #allocation1 [shape = 'u32[144,128]{1,0:T(1,128)}', space=vmem, size = 0x12000, scoped, tag = 'internal scratch']
  %s0 = inlined_call_operand.vmem [shape: f32[16,32], index: 0, kind: input, shape index: {}]
  %s1 = inlined_call_operand.vmem [shape: f32[64,32], index: 1, kind: input, shape index: {}]
  %s2 = inlined_call_operand.vmem [shape: f32[1,64], index: 2, kind: input, shape index: {}]
  %s3 = inlined_call_operand.hbm [shape: f32[16,64], index: 3, kind: output, shape index: {}]
  %s4 = sld [smem:[#allocation0]]
  $region22: #{tpu_custom_call.1} parent=0
    _
  %s6 = ssub.s32 1, %s4
  %s7 = scalar_select 0, %s6, %s4
  $region1: #{tpu_custom_call.1} parent=0
    #allocation2 [shape = 'u8[8192]{0}', space=vmem, size = 0x2000, scoped, tag = 'output window, operand 0, single buffered']
    #allocation3 [shape = 's32[1]{0}', space=sflag, size = 0x4, scoped, tag = 'scoped memory for tpu_custom_call.1']
    %8 = vsyncpa [#allocation3], 0
    // Predicated region
    $region2: #{tpu_custom_call.1} parent=1 // pred_check
      _
    $region3: #{tpu_custom_call.1} parent=1 // pred_check_branch
      %10 = sbr.rel (0) target = $region5
    $region4: #{tpu_custom_call.1} parent=1 // pred_region
      _
    $region5: #{tpu_custom_call.1} parent=1 // pred_fallthru
      _
    // Predicated region
    $region6: #{tpu_custom_call.1} parent=1 // pred_check
      _
    $region7: #{tpu_custom_call.1} parent=1 // pred_check_branch
      %12 = sbr.rel (0) target = $region9
    $region8: #{tpu_custom_call.1} parent=1 // pred_region
      _
    $region9: #{tpu_custom_call.1} parent=1 // pred_fallthru
      _
    // Predicated region
    $region10: #{tpu_custom_call.1} parent=1 // pred_check
      _
    $region11: #{tpu_custom_call.1} parent=1 // pred_check_branch
      %14 = sbr.rel (0) target = $region13
    $region12: #{tpu_custom_call.1} parent=1 // pred_region
      _
    $region13: #{tpu_custom_call.1} parent=1 // pred_fallthru
      _
    %v15 = vld [vmem:[%s0] sm:$0xff]
    %v16 = vld [vmem:[%s0 + $0x8] sm:$0xff]
    %v17 = vld [vmem:[%s1] sm:$0xff]
    %v18 = vld [vmem:[%s1 + $0x8] sm:$0xff]
    %v19 = vld [vmem:[%s1 + $0x10] sm:$0xff]
    %v20 = vld [vmem:[%s1 + $0x18] sm:$0xff]
    %v21 = vld [vmem:[%s1 + $0x20] sm:$0xff]
    %v22 = vld [vmem:[%s1 + $0x28] sm:$0xff]
    %v23 = vld [vmem:[%s1 + $0x30] sm:$0xff]
    %v24 = vld [vmem:[%s1 + $0x38] sm:$0xff]
    %v25 = vld [vmem:[%s2] sm:$0x1]
    %v27 = vlaneseq
    %v28 = vshrl.u32 %v27, 7
    %v29 = vsub.s32 0, %v28
    %v30 = vrot.slane %v25, %v29
    %vm32 = vcmask 261120
    %v34 = vsel %vm32, %v15, 0
    %v37 = vsel %vm32, %v16, 0
    %v40 = vsel %vm32, %v17, 0
    %v43 = vsel %vm32, %v18, 0
    %v46 = vsel %vm32, %v19, 0
    %v49 = vsel %vm32, %v20, 0
    %v52 = vsel %vm32, %v21, 0
    %v55 = vsel %vm32, %v22, 0
    %v58 = vsel %vm32, %v23, 0
    %v61 = vsel %vm32, %v24, 0
    %63 = vmatprep.subr.mxu0 0.0
    %64 = vmatpush1.xpose.msra.mxu0 0.0
    %65 = vmatprep.subr.mxu0 0.0
    %66 = vmatpush1.xpose.msra.mxu0 0.0
    %67 = vmatprep.subr.mxu0 0.0
    %68 = vmatpush1.xpose.msra.mxu0 0.0
    %69 = vmatprep.subr.mxu0 0.0
    %70 = vmatpush1.xpose.msra.mxu0 0.0
    %71 = vmatprep.subr.mxu0 0.0
    %72 = vmatpush1.xpose.msra.mxu0 0.0
    %73 = vmatprep.subr.mxu0 0.0
    %74 = vmatpush1.xpose.msra.mxu0 0.0
    %75 = vmatprep.subr.mxu0 0.0
    %76 = vmatpush1.xpose.msra.mxu0 0.0
    %77 = vmatprep.subr.mxu0 0.0
    %78 = vmatpush1.xpose.msra.mxu0 0.0
    %79 = vmatprep.subr.mxu0 0.0
    %80 = vmatpush1.xpose.msra.mxu0 %v61
    %81 = vmatprep.subr.mxu0 0.0
    %82 = vmatpush1.xpose.msra.mxu0 %v58
    %83 = vmatprep.subr.mxu0 0.0
    %84 = vmatpush1.xpose.msra.mxu0 %v55
    %85 = vmatprep.subr.mxu0 0.0
    %86 = vmatpush1.xpose.msra.mxu0 %v52
    %87 = vmatprep.subr.mxu0 0.0
    %88 = vmatpush1.xpose.msra.mxu0 %v49
    %89 = vmatprep.subr.mxu0 0.0
    %90 = vmatpush1.xpose.msra.mxu0 %v46
    %91 = vmatprep.subr.mxu0 0.0
    %92 = vmatpush1.xpose.msra.mxu0 %v43
    %93 = vmatprep.subr.mxu0 0.0
    %94 = vmatpush1.xpose.msra.mxu0 %v40
    %95 = vmatprep.subr.mxu0 0.0
    %96 = vmatpush2.xpose.msra.mxu0 0.0
    %97 = vmatprep.subr.mxu0 0.0
    %98 = vmatpush2.xpose.msra.mxu0 0.0
    %99 = vmatprep.subr.mxu0 0.0
    %100 = vmatpush2.xpose.msra.mxu0 0.0
    %101 = vmatprep.subr.mxu0 0.0
    %102 = vmatpush2.xpose.msra.mxu0 0.0
    %103 = vmatprep.subr.mxu0 0.0
    %104 = vmatpush2.xpose.msra.mxu0 0.0
    %105 = vmatprep.subr.mxu0 0.0
    %106 = vmatpush2.xpose.msra.mxu0 0.0
    %107 = vmatprep.subr.mxu0 0.0
    %108 = vmatpush2.xpose.msra.mxu0 0.0
    %109 = vmatprep.subr.mxu0 0.0
    %110 = vmatpush2.xpose.msra.mxu0 0.0
    %111 = vmatprep.subr.mxu0 0.0
    %112 = vmatpush2.xpose.msra.mxu0 0.0
    %113 = vmatprep.subr.mxu0 0.0
    %114 = vmatpush2.xpose.msra.mxu0 0.0
    %115 = vmatprep.subr.mxu0 0.0
    %116 = vmatpush2.xpose.msra.mxu0 0.0
    %117 = vmatprep.subr.mxu0 0.0
    %118 = vmatpush2.xpose.msra.mxu0 0.0
    %119 = vmatprep.subr.mxu0 0.0
    %120 = vmatpush2.xpose.msra.mxu0 0.0
    %121 = vmatprep.subr.mxu0 0.0
    %122 = vmatpush2.xpose.msra.mxu0 0.0
    %123 = vmatprep.subr.mxu0 0.0
    %124 = vmatpush2.xpose.msra.mxu0 0.0
    %125 = vmatprep.subr.mxu0 0.0
    %126 = vmatpush2.xpose.msra.mxu0 0.0
    %127 = vmatprep.mubr.f32.mxu0 0.0
    %128 = vmatmul.mubr.f32.gmra.mxu0 %v34
    %v129 = vpop.f32.mrf.mxu0
    %v130 = vadd.f32 %v30, %v129
    %v131 = vpop.f32.mrf.mxu0
    %132 = vmatprep.mubr.f32.mxu0 0.0
    %133 = vmatmul.mubr.f32.gmra.mxu0 %v37
    %v134 = vpop.f32.mrf.mxu0
    %v135 = vadd.f32 %v30, %v134
    %v136 = vpop.f32.mrf.mxu0
    %137 = vdwg.mxu0
    %v138 = vmul.f32 %v130, 0.5
    %v139 = vmul.f32 %v135, 0.5
    %v140 = vmul.f32 %v130, 0.70710677
    %v141 = vmul.f32 %v135, 0.70710677
    %v142 = verf.f32.pop %v140
    %v143 = verf.f32.pop %v141
    %v144 = vadd.f32 %v142, 1.0
    %v145 = vadd.f32 %v143, 1.0
    %v146 = vmul.f32 %v138, %v144
    %v147 = vmul.f32 %v139, %v145
    %vm148 = vcmask 523264
    %149 = vst.msk [vmem:[#allocation2] sm:$0xff] %vm148, %v146
    %150 = vst.msk [vmem:[#allocation2 + $0x8] sm:$0xff] %vm148, %v147
    // Predicated region
    $region14: #{tpu_custom_call.1} parent=1 // pred_check
      _
    $region15: #{tpu_custom_call.1} parent=1 // pred_check_branch
      %152 = sbr.rel (0) target = $region17
    $region16: #{tpu_custom_call.1} parent=1 // pred_region
      %s154 = ssub.s32 256, 256
      %155 = vsyncadd [#allocation3], %s154
      %s156 = sshll.u32 [#allocation2], 4
      %s157 = int_to_ptr.vmem [resolvable:$true] %s156
      %162 = dma.vmem_to_hbm [thread:$0]  %s157, 256, %s3, [#allocation3], 128, 128, 8
    $region17: #{tpu_custom_call.1} parent=1 // pred_fallthru
      _
    // Predicated region
    $region18: #{tpu_custom_call.1} parent=1 // pred_check
      _
    $region19: #{tpu_custom_call.1} parent=1 // pred_check_branch
      %164 = sbr.rel (0) target = $region21
    $region20: #{tpu_custom_call.1} parent=1 // pred_region
      %165 = dma.done [#allocation3], 256
    $region21: #{tpu_custom_call.1} parent=1 // pred_fallthru
      _
    %166 = vsyncpa [#allocation3], 1

</llo_original>
